<compile_context>
chip_gen: v7x
topology: tpu7x:2x2x1
jax: 0.10.0
libtpu: 0.0.40
codegen_flags: <defaults>
</compile_context>

<pallas_src>
import math
import functools

import jax
import jax.numpy as jnp
from jax import lax
from jax.experimental import pallas as pl
from jax.experimental.pallas import tpu as pltpu


def _attention_kernel(qkv_ref, o_ref, *, scale):
    # qkv_ref: (3, Bt, S, H) packed Q/K/V block; o_ref: (Bt, S, H)
    q = qkv_ref[0]
    k = qkv_ref[1]
    v = qkv_ref[2]

    # qk[b, s, t] = sum_h q[b, s, h] * k[b, t, h] — contraction on the last dims,
    # no explicit k.T materialization (Mosaic feeds the transposed operand to the
    # MXU natively). f32 accumulation.
    qk = lax.dot_general(
        q, k,
        dimension_numbers=(((2,), (2,)), ((0,), (0,))),
        preferred_element_type=jnp.float32,
    )  # (Bt, S, S)

    # PyTorch does qk.div(1/sqrt(head_dim)) which is a MULTIPLY by sqrt(head_dim).
    # Intentionally preserved to match the module's (buggy) semantics; this is why
    # the max-subtraction below is genuinely needed (logits reach O(80)).
    scaled = qk * scale

    # Numerically-stable softmax over the last axis, all in f32.
    m = jnp.max(scaled, axis=-1, keepdims=True)
    e = jnp.exp(scaled - m)
    p = e / jnp.sum(e, axis=-1, keepdims=True)   # exact divide (see header note)

    # TODO(synk): nn.Dropout(p=0.2) is stochastic in train mode; implemented here as
    # eval-mode identity so the kernel is deterministic. Use pltpu.prng_seed +
    # pltpu.stateful_bernoulli if train-mode masking is ever required.

    # out[b, s, h] = sum_t p[b, s, t] * v[b, t, h]
    out = lax.dot_general(
        p.astype(v.dtype), v,
        dimension_numbers=(((2,), (1,)), ((0,), (0,))),
        preferred_element_type=jnp.float32,
    )  # (Bt, S, H)

    o_ref[...] = out.astype(o_ref.dtype)


def _pick_batch_block(B, S, H, itemsize, batch_block):
    """Default Bt = largest divisor of B that is <= B//2 (so v7x megacore gets >=2
    grid steps when B > 1), clamped so the pipelined working set stays within a
    conservative 24 MiB VMEM budget (v7x scoped default is 32 MiB)."""
    if batch_block is None:
        Bt = max(1, B // 2)
    else:
        Bt = max(1, min(batch_block, B))
    while B % Bt != 0:
        Bt -= 1
    # (3 input tiles + 1 output tile) * double buffering
    vmem_budget = 24 << 20
    per_batch_bytes = S * H * itemsize * 4 * 2
    while Bt > 1 and Bt * per_batch_bytes > vmem_budget:
        Bt -= 1
        while B % Bt != 0:
            Bt -= 1
    return Bt


def attention_pallas(query, key, value, hidden_size, *, batch_block=None):
    B, S, H = query.shape
    assert H == hidden_size
    head_dim = hidden_size // 4
    scale = math.sqrt(head_dim)           # qk.div(1/scale) == qk * scale

    # Single packed operand -> one DMA issue instead of three tiny ones.
    qkv = jnp.stack([query, key, value], axis=0)   # (3, B, S, H)

    kernel = functools.partial(_attention_kernel, scale=scale)
    out_shape = jax.ShapeDtypeStruct((B, S, H), query.dtype)

    Bt = _pick_batch_block(B, S, H, query.dtype.itemsize, batch_block)
    num_steps = B // Bt

    if num_steps == 1:
        # Grid-free path: whole arrays resident in VMEM, no auto-pipeline
        # bookkeeping, no redundant double buffers. This is the path taken for
        # the module's B=1 shapes.
        return pl.pallas_call(
            kernel,
            out_shape=out_shape,
            in_specs=[pl.BlockSpec(memory_space=pltpu.MemorySpace.VMEM)],
            out_specs=pl.BlockSpec(memory_space=pltpu.MemorySpace.VMEM),
        )(qkv)

    # Gridded path (B > 1): batch axis is fully parallel -> megacore-shardable.
    return pl.pallas_call(
        kernel,
        out_shape=out_shape,
        grid_spec=pl.GridSpec(
            grid=(num_steps,),
            in_specs=[
                pl.BlockSpec((3, Bt, S, H), lambda b: (0, b, 0, 0)),
            ],
            out_specs=pl.BlockSpec((Bt, S, H), lambda b: (b, 0, 0)),
        ),
        compiler_params=pltpu.CompilerParams(
            dimension_semantics=("parallel",),
        ),
    )(qkv)


def attention_ref(query, key, value, hidden_size):
    head_dim = hidden_size // 4
    scale = math.sqrt(head_dim)
    qk = jnp.einsum("bsh,bth->bst", query, key)
    scaled = qk * scale                     # reproduce the div(1/scale) bug
    p = jax.nn.softmax(scaled, axis=-1)
    return jnp.einsum("bst,bth->bsh", p, value)


if __name__ == "__main__":
    hidden_size = 64
    num_qkv = 8
    batch = 1

    rng = jax.random.PRNGKey(0)
    kq, kk, kv = jax.random.split(rng, 3)
    query = jax.random.normal(kq, (batch, num_qkv, hidden_size), dtype=jnp.float32)
    key = jax.random.normal(kk, (batch, num_qkv, hidden_size), dtype=jnp.float32)
    value = jax.random.normal(kv, (batch, num_qkv, hidden_size), dtype=jnp.float32)

    out = attention_pallas(query, key, value, hidden_size)
    out = jax.block_until_ready(out)

    ref = attention_ref(query, key, value, hidden_size)
    assert out.shape == (batch, num_qkv, hidden_size)
    # Exact divide restored (no approx reciprocal). Tolerance kept at 1e-2 only to
    # cover f32-via-bf16-pass MXU differences vs. the XLA reference dot at the
    # O(80) logit magnitudes induced by the module's div(1/scale) multiply bug.
    assert jnp.allclose(out, ref, atol=1e-2, rtol=1e-2)

    print("KERNEL_OK")
</pallas_src>

<mosaic_0001>
module attributes {stable_mosaic.version = 11 : i64} {
  func.func @_attention_kernel(%arg0: memref<3x1x8x64xf32, #tpu.memory_space<vmem>>, %arg1: memref<1x8x64xf32, #tpu.memory_space<vmem>>) attributes {dimension_semantics = [], scalar_prefetch = 0 : i64, scratch_operands = 0 : i64, tpu.core_type = #tpu.core_type<tc>} {
    %c0 = arith.constant 0 : index
    %c0_0 = arith.constant 0 : index
    %c0_1 = arith.constant 0 : index
    %c0_2 = arith.constant 0 : index
    %0 = vector.load %arg0[%c0, %c0_0, %c0_1, %c0_2] : memref<3x1x8x64xf32, #tpu.memory_space<vmem>>, vector<1x1x8x64xf32>
    %1 = vector.shape_cast %0 : vector<1x1x8x64xf32> to vector<1x8x64xf32>
    %c1 = arith.constant 1 : index
    %c0_3 = arith.constant 0 : index
    %c0_4 = arith.constant 0 : index
    %c0_5 = arith.constant 0 : index
    %2 = vector.load %arg0[%c1, %c0_3, %c0_4, %c0_5] : memref<3x1x8x64xf32, #tpu.memory_space<vmem>>, vector<1x1x8x64xf32>
    %3 = vector.shape_cast %2 : vector<1x1x8x64xf32> to vector<1x8x64xf32>
    %c2 = arith.constant 2 : index
    %c0_6 = arith.constant 0 : index
    %c0_7 = arith.constant 0 : index
    %c0_8 = arith.constant 0 : index
    %4 = vector.load %arg0[%c2, %c0_6, %c0_7, %c0_8] : memref<3x1x8x64xf32, #tpu.memory_space<vmem>>, vector<1x1x8x64xf32>
    %5 = vector.shape_cast %4 : vector<1x1x8x64xf32> to vector<1x8x64xf32>
    %cst = arith.constant dense<0.000000e+00> : vector<1x8x8xf32>
    %6 = tpu.matmul %1, %3, %cst {dimension_numbers = #tpu.dot_dimension_numbers<[2], [2], [1], [1], [0, 0, 0, 1, 1, 1], [0], [0]>} : vector<1x8x64xf32>, vector<1x8x64xf32>, vector<1x8x8xf32> -> vector<1x8x8xf32>
    %cst_9 = arith.constant 4.000000e+00 : f32
    %7 = vector.broadcast %cst_9 : f32 to vector<1x8x8xf32>
    %8 = arith.mulf %6, %7 : vector<1x8x8xf32>
    %cst_10 = arith.constant dense<0xFF800000> : vector<1x8xf32>
    %9 = vector.multi_reduction <maximumf>, %8, %cst_10 [2] : vector<1x8x8xf32> to vector<1x8xf32>
    %10 = vector.shape_cast %9 : vector<1x8xf32> to vector<1x8x1xf32>
    %11 = vector.broadcast %10 : vector<1x8x1xf32> to vector<1x8x8xf32>
    %12 = arith.subf %8, %11 : vector<1x8x8xf32>
    %13 = math.exp %12 : vector<1x8x8xf32>
    %cst_11 = arith.constant dense<0.000000e+00> : vector<1x8xf32>
    %14 = vector.multi_reduction <add>, %13, %cst_11 [2] : vector<1x8x8xf32> to vector<1x8xf32>
    %15 = vector.shape_cast %14 : vector<1x8xf32> to vector<1x8x1xf32>
    %16 = vector.broadcast %15 : vector<1x8x1xf32> to vector<1x8x8xf32>
    %17 = arith.divf %13, %16 : vector<1x8x8xf32>
    %cst_12 = arith.constant dense<0.000000e+00> : vector<1x8x64xf32>
    %18 = tpu.matmul %17, %5, %cst_12 {dimension_numbers = #tpu.dot_dimension_numbers<[2], [1], [1], [2], [0, 0, 0, 1, 1, 2], [0], [0]>} : vector<1x8x8xf32>, vector<1x8x64xf32>, vector<1x8x64xf32> -> vector<1x8x64xf32>
    %c0_13 = arith.constant 0 : index
    %c0_14 = arith.constant 0 : index
    %c0_15 = arith.constant 0 : index
    %19 = vector.load %arg1[%c0_13, %c0_14, %c0_15] : memref<1x8x64xf32, #tpu.memory_space<vmem>>, vector<1x8x64xf32>
    tpu.vector_store %arg1[%c0_13, %c0_14, %c0_15], %18 {strides = array<i32>} : memref<1x8x64xf32, #tpu.memory_space<vmem>>, vector<1x8x64xf32>,
    return
  }
}

</mosaic_0001>

<llo_original>
// kernel: tpu_custom_call.1
$region0: #{tpu_custom_call.1}
  #allocation0 [shape = 'u32[]', space=smem, size = 0x4, offset = 0x4, fixed_abs, tag = 'smem constant byte address 0x4 - core index']
  #allocation1 [shape = 'u32[144,128]{1,0:T(1,128)}', space=vmem, size = 0x12000, scoped, tag = 'internal scratch']
  %s0 = inlined_call_operand.hbm [shape: f32[3,1,8,64], index: 0, kind: input, shape index: {}]
  %s1 = inlined_call_operand.hbm [shape: f32[1,8,64], index: 1, kind: output, shape index: {}]
  %s2 = sld [smem:[#allocation0]]
  $region18: #{tpu_custom_call.1} parent=0
    _
  %s4 = ssub.s32 1, %s2
  %s5 = scalar_select 0, %s4, %s2
  $region1: #{tpu_custom_call.1} parent=0
    #allocation2 [shape = 'u8[12288]{0}', space=vmem, size = 0x3000, scoped, tag = 'input window, operand 0, single buffered']
    #allocation3 [shape = 's32[1]{0}', space=sflag, size = 0x4, scoped, tag = 'scoped memory for tpu_custom_call.1']
    #allocation4 [shape = 's32[1]{0}', space=sflag, size = 0x4, scoped, tag = 'scoped memory for tpu_custom_call.1']
    #allocation5 [shape = 'u8[4096]{0}', space=vmem, size = 0x1000, scoped, tag = 'output window, operand 0, single buffered']
    %6 = vsyncpa [#allocation3], 0
    %7 = vsyncpa [#allocation4], 0
    // Predicated region
    $region2: #{tpu_custom_call.1} parent=1 // pred_check
      _
    $region3: #{tpu_custom_call.1} parent=1 // pred_check_branch
      %9 = sbr.rel (0) target = $region5
    $region4: #{tpu_custom_call.1} parent=1 // pred_region
      %s11 = ssub.s32 384, 384
      %12 = vsyncadd [#allocation3], %s11
      %s13 = sshll.u32 [#allocation2], 4
      %s14 = int_to_ptr.vmem [resolvable:$true] %s13
      %19 = dma.hbm_to_vmem [thread:$0]  %s0, 384, %s14, [#allocation3], 128, 128, 8
    $region5: #{tpu_custom_call.1} parent=1 // pred_fallthru
      _
    // Predicated region
    $region6: #{tpu_custom_call.1} parent=1 // pred_check
      _
    $region7: #{tpu_custom_call.1} parent=1 // pred_check_branch
      %21 = sbr.rel (0) target = $region9
    $region8: #{tpu_custom_call.1} parent=1 // pred_region
      %22 = dma.done [#allocation3], 384
    $region9: #{tpu_custom_call.1} parent=1 // pred_fallthru
      _
    %v23 = vld [vmem:[#allocation2] sm:$0xff]
    %s24 = scalar_lea.vmem [#allocation2], 8
    %v25 = vld [vmem:[%s24] sm:$0xff]
    %s26 = scalar_lea.vmem [#allocation2], 16
    %v27 = vld [vmem:[%s26] sm:$0xff]
    %vm28 = vcmask 523264
    %v30 = vsel %vm28, %v23, 0
    %v33 = vsel %vm28, %v25, 0
    %35 = vmatprep.subr.mxu0 0.0
    %36 = vmatpush1.xpose.msra.mxu0 %v33
    %37 = vmatprep.subr.mxu0 0.0
    %38 = vmatpush1.xpose.msra.mxu0 0.0
    %39 = vmatprep.subr.mxu0 0.0
    %40 = vmatpush1.xpose.msra.mxu0 0.0
    %41 = vmatprep.subr.mxu0 0.0
    %42 = vmatpush1.xpose.msra.mxu0 0.0
    %43 = vmatprep.subr.mxu0 0.0
    %44 = vmatpush1.xpose.msra.mxu0 0.0
    %45 = vmatprep.subr.mxu0 0.0
    %46 = vmatpush1.xpose.msra.mxu0 0.0
    %47 = vmatprep.subr.mxu0 0.0
    %48 = vmatpush1.xpose.msra.mxu0 0.0
    %49 = vmatprep.subr.mxu0 0.0
    %50 = vmatpush1.xpose.msra.mxu0 0.0
    %51 = vmatprep.subr.mxu0 0.0
    %52 = vmatpush1.xpose.msra.mxu0 0.0
    %53 = vmatprep.subr.mxu0 0.0
    %54 = vmatpush1.xpose.msra.mxu0 0.0
    %55 = vmatprep.subr.mxu0 0.0
    %56 = vmatpush1.xpose.msra.mxu0 0.0
    %57 = vmatprep.subr.mxu0 0.0
    %58 = vmatpush1.xpose.msra.mxu0 0.0
    %59 = vmatprep.subr.mxu0 0.0
    %60 = vmatpush1.xpose.msra.mxu0 0.0
    %61 = vmatprep.subr.mxu0 0.0
    %62 = vmatpush1.xpose.msra.mxu0 0.0
    %63 = vmatprep.subr.mxu0 0.0
    %64 = vmatpush1.xpose.msra.mxu0 0.0
    %65 = vmatprep.subr.mxu0 0.0
    %66 = vmatpush1.xpose.msra.mxu0 0.0
    %67 = vmatprep.subr.mxu0 0.0
    %68 = vmatpush1.xpose.msra.mxu0 0.0
    %69 = vmatprep.subr.mxu0 0.0
    %70 = vmatpush1.xpose.msra.mxu0 0.0
    %71 = vmatprep.subr.mxu0 0.0
    %72 = vmatpush1.xpose.msra.mxu0 0.0
    %73 = vmatprep.subr.mxu0 0.0
    %74 = vmatpush1.xpose.msra.mxu0 0.0
    %75 = vmatprep.subr.mxu0 0.0
    %76 = vmatpush1.xpose.msra.mxu0 0.0
    %77 = vmatprep.subr.mxu0 0.0
    %78 = vmatpush1.xpose.msra.mxu0 0.0
    %79 = vmatprep.subr.mxu0 0.0
    %80 = vmatpush1.xpose.msra.mxu0 0.0
    %81 = vmatprep.subr.mxu0 0.0
    %82 = vmatpush1.xpose.msra.mxu0 0.0
    %83 = vmatprep.subr.mxu0 0.0
    %84 = vmatpush1.xpose.msra.mxu0 0.0
    %85 = vmatprep.subr.mxu0 0.0
    %86 = vmatpush1.xpose.msra.mxu0 0.0
    %87 = vmatprep.subr.mxu0 0.0
    %88 = vmatpush1.xpose.msra.mxu0 0.0
    %89 = vmatprep.subr.mxu0 0.0
    %90 = vmatpush1.xpose.msra.mxu0 0.0
    %91 = vmatprep.subr.mxu0 0.0
    %92 = vmatpush1.xpose.msra.mxu0 0.0
    %93 = vmatprep.subr.mxu0 0.0
    %94 = vmatpush1.xpose.msra.mxu0 0.0
    %95 = vmatprep.subr.mxu0 0.0
    %96 = vmatpush1.xpose.msra.mxu0 0.0
    %97 = vmatprep.subr.mxu0 0.0
    %98 = vmatpush1.xpose.msra.mxu0 0.0
    %99 = vmatprep.mubr.f32.mxu0 0.0
    %100 = vmatmul.mubr.f32.gmra.mrb[0].mxu0 %v30
    %v101 = vpop.f32.mrb[0].mxu0
    %v102 = vadd.f32 0.0, %v101
    %v103 = vpop.f32.mrb[0].mxu0
    %104 = vdwg.mxu0
    %v105 = vmul.f32 %v102, 4.0
    %vm106 = vcmask 64512
    %v107 = vsel %vm106, %v105, -inf
    %108 = vmax.xlane.f32.xlu0 %v107
    %v109 = vpop.xlane.xlu0 %108
    %v110 = vsub.f32 %v105, %v109
    %v111 = vmul.f32 %v110, 1.442695
    %v112 = vpow.pop %v111
    %v113 = vsel %vm106, %v112, 0.0
    %114 = vadd.xlane.f32.xlu0 %v113
    %v115 = vpop.xlane.xlu0 %114
    %v116 = vrcp.pop %v115
    %v117 = vmul.f32 %v112, %v116
    %v119 = vsel %vm106, %v117, 0
    %121 = vmatprep.subr.mxu0 0.0
    %122 = vmatpush1.msra.mxu0 %v27
    %123 = vmatprep.subr.mxu0 0.0
    %124 = vmatpush1.msra.mxu0 0.0
    %125 = vmatprep.subr.mxu0 0.0
    %126 = vmatpush1.msra.mxu0 0.0
    %127 = vmatprep.subr.mxu0 0.0
    %128 = vmatpush1.msra.mxu0 0.0
    %129 = vmatprep.subr.mxu0 0.0
    %130 = vmatpush1.msra.mxu0 0.0
    %131 = vmatprep.subr.mxu0 0.0
    %132 = vmatpush1.msra.mxu0 0.0
    %133 = vmatprep.subr.mxu0 0.0
    %134 = vmatpush1.msra.mxu0 0.0
    %135 = vmatprep.subr.mxu0 0.0
    %136 = vmatpush1.msra.mxu0 0.0
    %137 = vmatprep.subr.mxu0 0.0
    %138 = vmatpush1.msra.mxu0 0.0
    %139 = vmatprep.subr.mxu0 0.0
    %140 = vmatpush1.msra.mxu0 0.0
    %141 = vmatprep.subr.mxu0 0.0
    %142 = vmatpush1.msra.mxu0 0.0
    %143 = vmatprep.subr.mxu0 0.0
    %144 = vmatpush1.msra.mxu0 0.0
    %145 = vmatprep.subr.mxu0 0.0
    %146 = vmatpush1.msra.mxu0 0.0
    %147 = vmatprep.subr.mxu0 0.0
    %148 = vmatpush1.msra.mxu0 0.0
    %149 = vmatprep.subr.mxu0 0.0
    %150 = vmatpush1.msra.mxu0 0.0
    %151 = vmatprep.subr.mxu0 0.0
    %152 = vmatpush1.msra.mxu0 0.0
    %153 = vmatprep.subr.mxu0 0.0
    %154 = vmatpush1.msra.mxu0 0.0
    %155 = vmatprep.subr.mxu0 0.0
    %156 = vmatpush1.msra.mxu0 0.0
    %157 = vmatprep.subr.mxu0 0.0
    %158 = vmatpush1.msra.mxu0 0.0
    %159 = vmatprep.subr.mxu0 0.0
    %160 = vmatpush1.msra.mxu0 0.0
    %161 = vmatprep.subr.mxu0 0.0
    %162 = vmatpush1.msra.mxu0 0.0
    %163 = vmatprep.subr.mxu0 0.0
    %164 = vmatpush1.msra.mxu0 0.0
    %165 = vmatprep.subr.mxu0 0.0
    %166 = vmatpush1.msra.mxu0 0.0
    %167 = vmatprep.subr.mxu0 0.0
    %168 = vmatpush1.msra.mxu0 0.0
    %169 = vmatprep.subr.mxu0 0.0
    %170 = vmatpush1.msra.mxu0 0.0
    %171 = vmatprep.subr.mxu0 0.0
    %172 = vmatpush1.msra.mxu0 0.0
    %173 = vmatprep.subr.mxu0 0.0
    %174 = vmatpush1.msra.mxu0 0.0
    %175 = vmatprep.subr.mxu0 0.0
    %176 = vmatpush1.msra.mxu0 0.0
    %177 = vmatprep.subr.mxu0 0.0
    %178 = vmatpush1.msra.mxu0 0.0
    %179 = vmatprep.subr.mxu0 0.0
    %180 = vmatpush1.msra.mxu0 0.0
    %181 = vmatprep.subr.mxu0 0.0
    %182 = vmatpush1.msra.mxu0 0.0
    %183 = vmatprep.subr.mxu0 0.0
    %184 = vmatpush1.msra.mxu0 0.0
    %185 = vmatprep.mubr.f32.mxu0 0.0
    %186 = vmatmul.mubr.f32.gmra.mrb[0].mxu0 %v119
    %v187 = vpop.f32.mrb[0].mxu0
    %v188 = vadd.f32 0.0, %v187
    %v189 = vpop.f32.mrb[0].mxu0
    %190 = vdwg.mxu0
    %191 = vst.msk [vmem:[#allocation5] sm:$0xff] %vm28, %v188
    // Predicated region
    $region10: #{tpu_custom_call.1} parent=1 // pred_check
      _
    $region11: #{tpu_custom_call.1} parent=1 // pred_check_branch
      %193 = sbr.rel (0) target = $region13
    $region12: #{tpu_custom_call.1} parent=1 // pred_region
      %s195 = ssub.s32 128, 128
      %196 = vsyncadd [#allocation4], %s195
      %s198 = sshll.u32 [#allocation5], 4
      %s199 = int_to_ptr.vmem [resolvable:$true] %s198
      %201 = dma.vmem_to_hbm [thread:$0]  %s199, 128, %s1, [#allocation4]
    $region13: #{tpu_custom_call.1} parent=1 // pred_fallthru
      _
    // Predicated region
    $region14: #{tpu_custom_call.1} parent=1 // pred_check
      _
    $region15: #{tpu_custom_call.1} parent=1 // pred_check_branch
      %203 = sbr.rel (0) target = $region17
    $region16: #{tpu_custom_call.1} parent=1 // pred_region
      %204 = dma.done [#allocation4], 128
    $region17: #{tpu_custom_call.1} parent=1 // pred_fallthru
      _
    %205 = vsyncpa [#allocation3], 1
    %206 = vsyncpa [#allocation4], 1

</llo_original>
